<compile_context>
chip_gen: v7x
topology: tpu7x:2x2x1
jax: 0.10.0
libtpu: 0.0.40
codegen_flags: <defaults>
</compile_context>

<pallas_src>
import jax
import jax.numpy as jnp
from jax.experimental import pallas as pl
from jax.experimental.pallas import tpu as pltpu

BN_EPS = 1e-3

_LANE = 128
_MAX_HW_TILE = 8192
_VMEM_BLOCK_BUDGET = 24 * 1024 * 1024   # live double-buffered blocks
_VMEM_LIMIT_BYTES = 48 * 1024 * 1024    # scoped limit: > default, < v7x 64 MiB


def _round_up(x, m):
    return ((x + m - 1) // m) * m


def _pick_tiles(n, hw, c_ins, c_out, in_itemsize, out_itemsize):
    """VMEM/channel-aware (b_tile, hw_tile, hw_pad) selection."""
    sum_ci = sum(c_ins)
    # Bytes per (batch row, lane) element held live per grid step:
    # inputs + y output are double-buffered by the pipeline; one f32 working
    # copy of y per step is not.
    per_lane = 2 * (sum_ci * in_itemsize + c_out * out_itemsize) + c_out * 4

    hw_pad = _round_up(hw, _LANE)
    max_lanes = max(_LANE, (_VMEM_BLOCK_BUDGET // per_lane) // _LANE * _LANE)
    hw_tile = min(hw_pad, _MAX_HW_TILE, max_lanes)

    # Balance tiles so padding waste stays < 128 lanes per row.
    ns = pl.cdiv(hw_pad, hw_tile)
    hw_tile = _round_up(pl.cdiv(hw_pad, ns), _LANE)
    hw_pad = hw_tile * ns

    # Grow the batch tile (a divisor of n) while blocks still fit the budget,
    # so small-H*W cases issue fewer, fatter DMAs.
    b_tile = 1
    for cand in range(n, 0, -1):
        if n % cand == 0 and cand * hw_tile * per_lane <= _VMEM_BLOCK_BUDGET:
            b_tile = cand
            break
    return b_tile, hw_tile, hw_pad


def _make_stats_kernel(num_feats):
    """Pass 1: y = sum_f w_f @ x_f (written to HBM) + per-channel sum/sumsq."""
    def kernel(*args):
        x_refs = args[:num_feats]
        w_refs = args[num_feats:2 * num_feats]
        y_ref, sum_ref, sumsq_ref = args[2 * num_feats:]

        @pl.when(pl.program_id(1) == 0)   # first spatial step of this batch blk
        def _():
            sum_ref[...] = jnp.zeros_like(sum_ref)
            sumsq_ref[...] = jnp.zeros_like(sumsq_ref)

        b_tile = y_ref.shape[0]
        s_acc = jnp.zeros(sum_ref.shape, jnp.float32)
        sq_acc = jnp.zeros(sumsq_ref.shape, jnp.float32)
        for bi in range(b_tile):                       # small static unroll
            y = None
            for x_ref, w_ref in zip(x_refs, w_refs):
                part = jnp.dot(w_ref[...].astype(jnp.float32),
                               x_ref[bi].astype(jnp.float32),
                               preferred_element_type=jnp.float32)  # (Cout, T)
                y = part if y is None else y + part
            y_ref[bi] = y.astype(y_ref.dtype)
            s_acc = s_acc + jnp.sum(y, axis=1, keepdims=True)        # (Cout,1)
            sq_acc = sq_acc + jnp.sum(y * y, axis=1, keepdims=True)
        sum_ref[...] += s_acc
        sumsq_ref[...] += sq_acc

    return kernel


def _norm_kernel(y_ref, scale_ref, shift_ref, o_ref):
    """Pass 2: pure per-element folded-BN FMA + ReLU over stored y (VPU only)."""
    y = y_ref[...].astype(jnp.float32)                 # (b_tile, Cout, T)
    scale = scale_ref[...][None, :, :]                 # (1, Cout, 1)
    shift = shift_ref[...][None, :, :]
    o_ref[...] = jnp.maximum(y * scale + shift, 0.0).astype(o_ref.dtype)


def nddr_forward(features, conv_weight, gamma, beta, *, eps=BN_EPS):
    """features: list of NCHW arrays (same N, H, W). conv_weight: (Cout, Cin)."""
    n, _, h, w = features[0].shape
    hw = h * w
    c_out = conv_weight.shape[0]
    c_ins = [f.shape[1] for f in features]
    out_dtype = features[0].dtype
    num_feats = len(features)

    b_tile, hw_tile, hw_pad = _pick_tiles(
        n, hw, c_ins, c_out,
        in_itemsize=features[0].dtype.itemsize,
        out_itemsize=jnp.dtype(out_dtype).itemsize)

    # NCHW -> (N, Ci, H*W): a free view; pad lanes to a tile multiple only when
    # needed (zero-padding is exact for the stats since the conv has no bias).
    feats = [f.reshape(f.shape[0], f.shape[1], hw) for f in features]
    if hw_pad != hw:
        feats = [jnp.pad(f, ((0, 0), (0, 0), (0, hw_pad - hw))) for f in feats]

    # Split (Cout, Cin) into one (Cout, Ci) slab per feature; the channel
    # concat becomes a sum of per-feature matmuls inside the kernel.
    w_parts = []
    off = 0
    for ci in c_ins:
        w_parts.append(conv_weight[:, off:off + ci].astype(jnp.float32))
        off += ci
    assert off == conv_weight.shape[1], "feature channels must sum to Cin"

    nb = n // b_tile
    ns = hw_pad // hw_tile
    grid = (nb, ns)

    feat_specs = [
        pl.BlockSpec((b_tile, ci, hw_tile), lambda b, s: (b, 0, s))
        for ci in c_ins
    ]
    # NOTE: constant-index blocks (weights / scale / shift) are only re-DMA'd
    # when their block index changes, which it never does here.
    w_specs = [pl.BlockSpec((c_out, ci), lambda b, s: (0, 0)) for ci in c_ins]
    y_spec = pl.BlockSpec((b_tile, c_out, hw_tile), lambda b, s: (b, 0, s))
    stat_spec = pl.BlockSpec((None, c_out, 1), lambda b, s: (b, 0, 0))
    chan_spec = pl.BlockSpec((c_out, 1), lambda b, s: (0, 0))

    # ---- Pass 1: conv -> y (HBM) + per-batch-block channel sum / sumsq ----
    y, psum, psumsq = pl.pallas_call(
        _make_stats_kernel(num_feats),
        out_shape=(
            jax.ShapeDtypeStruct((n, c_out, hw_pad), out_dtype),
            jax.ShapeDtypeStruct((nb, c_out, 1), jnp.float32),
            jax.ShapeDtypeStruct((nb, c_out, 1), jnp.float32),
        ),
        grid=grid,
        in_specs=feat_specs + w_specs,
        out_specs=(y_spec, stat_spec, stat_spec),
        compiler_params=pltpu.CompilerParams(
            dimension_semantics=("parallel", "arbitrary"),
            vmem_limit_bytes=_VMEM_LIMIT_BYTES),
    )(*feats, *w_parts)

    # ---- Tiny per-channel math in plain JAX: fold BN into scale & shift ----
    m = float(n * hw)                              # true count (pad adds zeros)
    ysum = jnp.sum(psum, axis=0)                   # (Cout, 1)
    ysumsq = jnp.sum(psumsq, axis=0)
    mean = ysum / m
    var = ysumsq / m - mean * mean                 # biased variance (train BN)
    inv_std = jax.lax.rsqrt(var + eps)
    scale = gamma.reshape(c_out, 1).astype(jnp.float32) * inv_std
    shift = beta.reshape(c_out, 1).astype(jnp.float32) - mean * scale

    # ---- Pass 2: elementwise folded-BN FMA + ReLU, in place over y ----
    out_flat = pl.pallas_call(
        _norm_kernel,
        out_shape=jax.ShapeDtypeStruct((n, c_out, hw_pad), out_dtype),
        grid=grid,
        in_specs=[y_spec, chan_spec, chan_spec],
        out_specs=y_spec,
        input_output_aliases={0: 0},               # reuse the y buffer
        compiler_params=pltpu.CompilerParams(
            dimension_semantics=("parallel", "parallel"),
            vmem_limit_bytes=_VMEM_LIMIT_BYTES),
    )(y, scale, shift)

    if hw_pad != hw:
        out_flat = out_flat[:, :, :hw]
    return out_flat.reshape(n, c_out, h, w)


def make_nddr_weight(in_channels, out_channels, init_weights=(0.9, 0.1)):
    """Replicates the __init__ weight construction: concat of scaled identities."""
    assert in_channels >= out_channels and in_channels % out_channels == 0
    multiplier = in_channels // out_channels - 1
    blocks = [jnp.eye(out_channels, dtype=jnp.float32) * init_weights[0]]
    blocks += [
        jnp.eye(out_channels, dtype=jnp.float32) * init_weights[1] / float(multiplier)
        for _ in range(multiplier)
    ]
    # (Cout, Cin); the trailing (1,1) conv spatial dims are implicit.
    return jnp.concatenate(blocks, axis=1)


def _reference(features, conv_weight, gamma, beta, eps=BN_EPS):
    x = jnp.concatenate(features, axis=1)                       # (N, Cin, H, W)
    y = jnp.einsum("nihw,oi->nohw", x, conv_weight)             # 1x1 conv
    mean = jnp.mean(y, axis=(0, 2, 3), keepdims=True)
    var = jnp.mean((y - mean) ** 2, axis=(0, 2, 3), keepdims=True)
    yn = (y - mean) / jnp.sqrt(var + eps)
    yn = gamma.reshape(1, -1, 1, 1) * yn + beta.reshape(1, -1, 1, 1)
    return jnp.maximum(yn, 0.0)


if __name__ == "__main__":
    fwd = jax.jit(nddr_forward)

    # --- test 1: two 4-channel features, 16x16 spatial (Cin=8 -> Cout=4) ---
    k1, k2 = jax.random.split(jax.random.PRNGKey(0))
    N, C, H, W = 2, 4, 16, 16
    feat_a = jax.random.normal(k1, (N, C, H, W), dtype=jnp.float32)
    feat_b = jax.random.normal(k2, (N, C, H, W), dtype=jnp.float32)
    features = [feat_a, feat_b]

    conv_weight = make_nddr_weight(2 * C, C, init_weights=(0.9, 0.1))
    gamma = jnp.ones((C,), dtype=jnp.float32)   # BN weight init: 1
    beta = jnp.zeros((C,), dtype=jnp.float32)   # BN bias  init: 0

    out = jax.block_until_ready(fwd(features, conv_weight, gamma, beta))
    ref = _reference(features, conv_weight, gamma, beta)
    assert out.shape == (N, C, H, W), out.shape
    assert jnp.allclose(out, ref, atol=1e-4, rtol=1e-4), \
        float(jnp.max(jnp.abs(out - ref)))

    # --- test 2: three features, H*W (=64) not a multiple of 128 -> padded ---
    k3, k4, k5 = jax.random.split(jax.random.PRNGKey(1), 3)
    N2, C2, H2, W2 = 2, 4, 8, 8
    feats2 = [jax.random.normal(k, (N2, C2, H2, W2), dtype=jnp.float32)
              for k in (k3, k4, k5)]
    w2 = make_nddr_weight(3 * C2, C2, init_weights=(0.9, 0.1))
    out2 = jax.block_until_ready(fwd(feats2, w2, gamma, beta))
    ref2 = _reference(feats2, w2, gamma, beta)
    assert out2.shape == (N2, C2, H2, W2), out2.shape
    assert jnp.allclose(out2, ref2, atol=1e-4, rtol=1e-4), \
        float(jnp.max(jnp.abs(out2 - ref2)))

    print("KERNEL_OK")
</pallas_src>

<mosaic_0001>
module attributes {stable_mosaic.version = 11 : i64} {
  func.func @kernel(%arg0: i32, %arg1: i32, %arg2: memref<2x4x256xf32, #tpu.memory_space<vmem>>, %arg3: memref<2x4x256xf32, #tpu.memory_space<vmem>>, %arg4: memref<4x4xf32, #tpu.memory_space<vmem>>, %arg5: memref<4x4xf32, #tpu.memory_space<vmem>>, %arg6: memref<2x4x256xf32, #tpu.memory_space<vmem>>, %arg7: memref<1x4x1xf32, #tpu.memory_space<vmem>>, %arg8: memref<1x4x1xf32, #tpu.memory_space<vmem>>) attributes {dimension_semantics = [#tpu.dimension_semantics<parallel>, #tpu.dimension_semantics<arbitrary>], iteration_bounds = array<i64: 1, 1>, scalar_prefetch = 0 : i64, scratch_operands = 0 : i64, tpu.core_type = #tpu.core_type<tc>, window_params = [{transform_indices = @transform_0, window_bounds = array<i64: 2, 4, 256>}, {transform_indices = @transform_1, window_bounds = array<i64: 2, 4, 256>}, {pipeline_mode = #tpu.pipeline_mode<synchronous>, transform_indices = @transform_2, window_bounds = array<i64: 4, 4>}, {pipeline_mode = #tpu.pipeline_mode<synchronous>, transform_indices = @transform_3, window_bounds = array<i64: 4, 4>}, {transform_indices = @transform_4, window_bounds = array<i64: 2, 4, 256>}, {transform_indices = @transform_5, window_bounds = array<i64: 1, 4, 1>}, {transform_indices = @transform_6, window_bounds = array<i64: 1, 4, 1>}]} {
    %c0_i32 = arith.constant 0 : i32
    %0 = arith.cmpi eq, %arg1, %c0_i32 : i32
    %1 = arith.extui %0 : i1 to i32
    %c0_i32_0 = arith.constant 0 : i32
    %2 = arith.cmpi ne, %1, %c0_i32_0 : i32
    scf.if %2 {
      %cst_46 = arith.constant 0.000000e+00 : f32
      %55 = vector.broadcast %cst_46 : f32 to vector<4x1xf32>
      %c0_47 = arith.constant 0 : index
      %c0_48 = arith.constant 0 : index
      %c0_49 = arith.constant 0 : index
      %56 = vector.load %arg7[%c0_47, %c0_48, %c0_49] : memref<1x4x1xf32, #tpu.memory_space<vmem>>, vector<1x4x1xf32>
      %57 = vector.shape_cast %56 : vector<1x4x1xf32> to vector<4x1xf32>
      %58 = vector.shape_cast %55 : vector<4x1xf32> to vector<1x4x1xf32>
      tpu.vector_store %arg7[%c0_47, %c0_48, %c0_49], %58 {strides = array<i32>} : memref<1x4x1xf32, #tpu.memory_space<vmem>>, vector<1x4x1xf32>,
      %cst_50 = arith.constant 0.000000e+00 : f32
      %59 = vector.broadcast %cst_50 : f32 to vector<4x1xf32>
      %c0_51 = arith.constant 0 : index
      %c0_52 = arith.constant 0 : index
      %c0_53 = arith.constant 0 : index
      %60 = vector.load %arg8[%c0_51, %c0_52, %c0_53] : memref<1x4x1xf32, #tpu.memory_space<vmem>>, vector<1x4x1xf32>
      %61 = vector.shape_cast %60 : vector<1x4x1xf32> to vector<4x1xf32>
      %62 = vector.shape_cast %59 : vector<4x1xf32> to vector<1x4x1xf32>
      tpu.vector_store %arg8[%c0_51, %c0_52, %c0_53], %62 {strides = array<i32>} : memref<1x4x1xf32, #tpu.memory_space<vmem>>, vector<1x4x1xf32>,
    } else {
    }
    %cst = arith.constant 0.000000e+00 : f32
    %3 = vector.broadcast %cst : f32 to vector<4x1xf32>
    %cst_1 = arith.constant 0.000000e+00 : f32
    %4 = vector.broadcast %cst_1 : f32 to vector<4x1xf32>
    %c0 = arith.constant 0 : index
    %c0_2 = arith.constant 0 : index
    %5 = vector.load %arg4[%c0, %c0_2] : memref<4x4xf32, #tpu.memory_space<vmem>>, vector<4x4xf32>
    %c0_3 = arith.constant 0 : index
    %c0_4 = arith.constant 0 : index
    %c0_5 = arith.constant 0 : index
    %6 = vector.load %arg2[%c0_3, %c0_4, %c0_5] : memref<2x4x256xf32, #tpu.memory_space<vmem>>, vector<1x4x256xf32>
    %7 = vector.shape_cast %6 : vector<1x4x256xf32> to vector<4x256xf32>
    %cst_6 = arith.constant dense<0.000000e+00> : vector<4x256xf32>
    %8 = tpu.matmul %5, %7, %cst_6 {dimension_numbers = #tpu.dot_dimension_numbers<[1], [0], [0], [1], [0, 0, 1, 1], [], []>} : vector<4x4xf32>, vector<4x256xf32>, vector<4x256xf32> -> vector<4x256xf32>
    %c0_7 = arith.constant 0 : index
    %c0_8 = arith.constant 0 : index
    %9 = vector.load %arg5[%c0_7, %c0_8] : memref<4x4xf32, #tpu.memory_space<vmem>>, vector<4x4xf32>
    %c0_9 = arith.constant 0 : index
    %c0_10 = arith.constant 0 : index
    %c0_11 = arith.constant 0 : index
    %10 = vector.load %arg3[%c0_9, %c0_10, %c0_11] : memref<2x4x256xf32, #tpu.memory_space<vmem>>, vector<1x4x256xf32>
    %11 = vector.shape_cast %10 : vector<1x4x256xf32> to vector<4x256xf32>
    %cst_12 = arith.constant dense<0.000000e+00> : vector<4x256xf32>
    %12 = tpu.matmul %9, %11, %cst_12 {dimension_numbers = #tpu.dot_dimension_numbers<[1], [0], [0], [1], [0, 0, 1, 1], [], []>} : vector<4x4xf32>, vector<4x256xf32>, vector<4x256xf32> -> vector<4x256xf32>
    %13 = arith.addf %8, %12 : vector<4x256xf32>
    %c0_13 = arith.constant 0 : index
    %c0_14 = arith.constant 0 : index
    %c0_15 = arith.constant 0 : index
    %14 = vector.load %arg6[%c0_13, %c0_14, %c0_15] : memref<2x4x256xf32, #tpu.memory_space<vmem>>, vector<1x4x256xf32>
    %15 = vector.shape_cast %14 : vector<1x4x256xf32> to vector<4x256xf32>
    %16 = vector.shape_cast %13 : vector<4x256xf32> to vector<1x4x256xf32>
    tpu.vector_store %arg6[%c0_13, %c0_14, %c0_15], %16 {strides = array<i32>} : memref<2x4x256xf32, #tpu.memory_space<vmem>>, vector<1x4x256xf32>,
    %cst_16 = arith.constant dense<0.000000e+00> : vector<4xf32>
    %17 = vector.multi_reduction <add>, %13, %cst_16 [1] : vector<4x256xf32> to vector<4xf32>
    %18 = vector.shape_cast %17 : vector<4xf32> to vector<4x1xf32>
    %19 = arith.addf %3, %18 : vector<4x1xf32>
    %20 = arith.mulf %13, %13 : vector<4x256xf32>
    %cst_17 = arith.constant dense<0.000000e+00> : vector<4xf32>
    %21 = vector.multi_reduction <add>, %20, %cst_17 [1] : vector<4x256xf32> to vector<4xf32>
    %22 = vector.shape_cast %21 : vector<4xf32> to vector<4x1xf32>
    %23 = arith.addf %4, %22 : vector<4x1xf32>
    %c0_18 = arith.constant 0 : index
    %c0_19 = arith.constant 0 : index
    %24 = vector.load %arg4[%c0_18, %c0_19] : memref<4x4xf32, #tpu.memory_space<vmem>>, vector<4x4xf32>
    %c1 = arith.constant 1 : index
    %c0_20 = arith.constant 0 : index
    %c0_21 = arith.constant 0 : index
    %25 = vector.load %arg2[%c1, %c0_20, %c0_21] : memref<2x4x256xf32, #tpu.memory_space<vmem>>, vector<1x4x256xf32>
    %26 = vector.shape_cast %25 : vector<1x4x256xf32> to vector<4x256xf32>
    %cst_22 = arith.constant dense<0.000000e+00> : vector<4x256xf32>
    %27 = tpu.matmul %24, %26, %cst_22 {dimension_numbers = #tpu.dot_dimension_numbers<[1], [0], [0], [1], [0, 0, 1, 1], [], []>} : vector<4x4xf32>, vector<4x256xf32>, vector<4x256xf32> -> vector<4x256xf32>
    %c0_23 = arith.constant 0 : index
    %c0_24 = arith.constant 0 : index
    %28 = vector.load %arg5[%c0_23, %c0_24] : memref<4x4xf32, #tpu.memory_space<vmem>>, vector<4x4xf32>
    %c1_25 = arith.constant 1 : index
    %c0_26 = arith.constant 0 : index
    %c0_27 = arith.constant 0 : index
    %29 = vector.load %arg3[%c1_25, %c0_26, %c0_27] : memref<2x4x256xf32, #tpu.memory_space<vmem>>, vector<1x4x256xf32>
    %30 = vector.shape_cast %29 : vector<1x4x256xf32> to vector<4x256xf32>
    %cst_28 = arith.constant dense<0.000000e+00> : vector<4x256xf32>
    %31 = tpu.matmul %28, %30, %cst_28 {dimension_numbers = #tpu.dot_dimension_numbers<[1], [0], [0], [1], [0, 0, 1, 1], [], []>} : vector<4x4xf32>, vector<4x256xf32>, vector<4x256xf32> -> vector<4x256xf32>
    %32 = arith.addf %27, %31 : vector<4x256xf32>
    %c1_29 = arith.constant 1 : index
    %c0_30 = arith.constant 0 : index
    %c0_31 = arith.constant 0 : index
    %33 = vector.load %arg6[%c1_29, %c0_30, %c0_31] : memref<2x4x256xf32, #tpu.memory_space<vmem>>, vector<1x4x256xf32>
    %34 = vector.shape_cast %33 : vector<1x4x256xf32> to vector<4x256xf32>
    %35 = vector.shape_cast %32 : vector<4x256xf32> to vector<1x4x256xf32>
    tpu.vector_store %arg6[%c1_29, %c0_30, %c0_31], %35 {strides = array<i32>} : memref<2x4x256xf32, #tpu.memory_space<vmem>>, vector<1x4x256xf32>,
    %cst_32 = arith.constant dense<0.000000e+00> : vector<4xf32>
    %36 = vector.multi_reduction <add>, %32, %cst_32 [1] : vector<4x256xf32> to vector<4xf32>
    %37 = vector.shape_cast %36 : vector<4xf32> to vector<4x1xf32>
    %38 = arith.addf %19, %37 : vector<4x1xf32>
    %39 = arith.mulf %32, %32 : vector<4x256xf32>
    %cst_33 = arith.constant dense<0.000000e+00> : vector<4xf32>
    %40 = vector.multi_reduction <add>, %39, %cst_33 [1] : vector<4x256xf32> to vector<4xf32>
    %41 = vector.shape_cast %40 : vector<4xf32> to vector<4x1xf32>
    %42 = arith.addf %23, %41 : vector<4x1xf32>
    %c0_34 = arith.constant 0 : index
    %c0_35 = arith.constant 0 : index
    %c0_36 = arith.constant 0 : index
    %43 = vector.load %arg7[%c0_34, %c0_35, %c0_36] : memref<1x4x1xf32, #tpu.memory_space<vmem>>, vector<1x4x1xf32>
    %44 = vector.shape_cast %43 : vector<1x4x1xf32> to vector<4x1xf32>
    %45 = arith.addf %44, %38 : vector<4x1xf32>
    %c0_37 = arith.constant 0 : index
    %c0_38 = arith.constant 0 : index
    %c0_39 = arith.constant 0 : index
    %46 = vector.load %arg7[%c0_37, %c0_38, %c0_39] : memref<1x4x1xf32, #tpu.memory_space<vmem>>, vector<1x4x1xf32>
    %47 = vector.shape_cast %46 : vector<1x4x1xf32> to vector<4x1xf32>
    %48 = vector.shape_cast %45 : vector<4x1xf32> to vector<1x4x1xf32>
    tpu.vector_store %arg7[%c0_37, %c0_38, %c0_39], %48 {strides = array<i32>} : memref<1x4x1xf32, #tpu.memory_space<vmem>>, vector<1x4x1xf32>,
    %c0_40 = arith.constant 0 : index
    %c0_41 = arith.constant 0 : index
    %c0_42 = arith.constant 0 : index
    %49 = vector.load %arg8[%c0_40, %c0_41, %c0_42] : memref<1x4x1xf32, #tpu.memory_space<vmem>>, vector<1x4x1xf32>
    %50 = vector.shape_cast %49 : vector<1x4x1xf32> to vector<4x1xf32>
    %51 = arith.addf %50, %42 : vector<4x1xf32>
    %c0_43 = arith.constant 0 : index
    %c0_44 = arith.constant 0 : index
    %c0_45 = arith.constant 0 : index
    %52 = vector.load %arg8[%c0_43, %c0_44, %c0_45] : memref<1x4x1xf32, #tpu.memory_space<vmem>>, vector<1x4x1xf32>
    %53 = vector.shape_cast %52 : vector<1x4x1xf32> to vector<4x1xf32>
    %54 = vector.shape_cast %51 : vector<4x1xf32> to vector<1x4x1xf32>
    tpu.vector_store %arg8[%c0_43, %c0_44, %c0_45], %54 {strides = array<i32>} : memref<1x4x1xf32, #tpu.memory_space<vmem>>, vector<1x4x1xf32>,
    return
  }
  func.func @transform_0(%arg0: i32, %arg1: i32) -> (i32, i32, i32) {
    %c0_i32 = arith.constant 0 : i32
    %c0_i32_0 = arith.constant 0 : i32
    return %arg0, %c0_i32, %arg1 : i32, i32, i32
  }
  func.func @transform_1(%arg0: i32, %arg1: i32) -> (i32, i32, i32) {
    %c0_i32 = arith.constant 0 : i32
    %c0_i32_0 = arith.constant 0 : i32
    return %arg0, %c0_i32, %arg1 : i32, i32, i32
  }
  func.func @transform_2(%arg0: i32, %arg1: i32) -> (i32, i32) {
    %c0_i32 = arith.constant 0 : i32
    %c0_i32_0 = arith.constant 0 : i32
    %c0_i32_1 = arith.constant 0 : i32
    return %c0_i32, %c0_i32_0 : i32, i32
  }
  func.func @transform_3(%arg0: i32, %arg1: i32) -> (i32, i32) {
    %c0_i32 = arith.constant 0 : i32
    %c0_i32_0 = arith.constant 0 : i32
    %c0_i32_1 = arith.constant 0 : i32
    return %c0_i32, %c0_i32_0 : i32, i32
  }
  func.func @transform_4(%arg0: i32, %arg1: i32) -> (i32, i32, i32) {
    %c0_i32 = arith.constant 0 : i32
    %c0_i32_0 = arith.constant 0 : i32
    return %arg0, %c0_i32, %arg1 : i32, i32, i32
  }
  func.func @transform_5(%arg0: i32, %arg1: i32) -> (i32, i32, i32) {
    %c0_i32 = arith.constant 0 : i32
    %c0_i32_0 = arith.constant 0 : i32
    %c0_i32_1 = arith.constant 0 : i32
    return %arg0, %c0_i32, %c0_i32_0 : i32, i32, i32
  }
  func.func @transform_6(%arg0: i32, %arg1: i32) -> (i32, i32, i32) {
    %c0_i32 = arith.constant 0 : i32
    %c0_i32_0 = arith.constant 0 : i32
    %c0_i32_1 = arith.constant 0 : i32
    return %arg0, %c0_i32, %c0_i32_0 : i32, i32, i32
  }
}

module attributes {stable_mosaic.version = 11 : i64} {
  func.func @_norm_kernel(%arg0: i32, %arg1: i32, %arg2: memref<2x4x256xf32, #tpu.memory_space<vmem>>, %arg3: memref<4x1xf32, #tpu.memory_space<vmem>>, %arg4: memref<4x1xf32, #tpu.memory_space<vmem>>, %arg5: memref<2x4x256xf32, #tpu.memory_space<vmem>>) attributes {dimension_semantics = [#tpu.dimension_semantics<parallel>, #tpu.dimension_semantics<parallel>], iteration_bounds = array<i64: 1, 1>, scalar_prefetch = 0 : i64, scratch_operands = 0 : i64, tpu.core_type = #tpu.core_type<tc>, window_params = [{transform_indices = @transform_0, window_bounds = array<i64: 2, 4, 256>}, {pipeline_mode = #tpu.pipeline_mode<synchronous>, transform_indices = @transform_1, window_bounds = array<i64: 4, 1>}, {pipeline_mode = #tpu.pipeline_mode<synchronous>, transform_indices = @transform_2, window_bounds = array<i64: 4, 1>}, {transform_indices = @transform_3, window_bounds = array<i64: 2, 4, 256>}]} {
    %c0 = arith.constant 0 : index
    %c0_0 = arith.constant 0 : index
    %c0_1 = arith.constant 0 : index
    %0 = vector.load %arg2[%c0, %c0_0, %c0_1] : memref<2x4x256xf32, #tpu.memory_space<vmem>>, vector<2x4x256xf32>
    %c0_2 = arith.constant 0 : index
    %c0_3 = arith.constant 0 : index
    %1 = vector.load %arg3[%c0_2, %c0_3] : memref<4x1xf32, #tpu.memory_space<vmem>>, vector<4x1xf32>
    %2 = vector.shape_cast %1 : vector<4x1xf32> to vector<1x4x1xf32>
    %c0_4 = arith.constant 0 : index
    %c0_5 = arith.constant 0 : index
    %3 = vector.load %arg4[%c0_4, %c0_5] : memref<4x1xf32, #tpu.memory_space<vmem>>, vector<4x1xf32>
    %4 = vector.shape_cast %3 : vector<4x1xf32> to vector<1x4x1xf32>
    %5 = vector.broadcast %2 : vector<1x4x1xf32> to vector<2x4x256xf32>
    %6 = arith.mulf %0, %5 : vector<2x4x256xf32>
    %7 = vector.broadcast %4 : vector<1x4x1xf32> to vector<2x4x256xf32>
    %8 = arith.addf %6, %7 : vector<2x4x256xf32>
    %cst = arith.constant 0.000000e+00 : f32
    %9 = vector.broadcast %cst : f32 to vector<2x4x256xf32>
    %10 = arith.maximumf %8, %9 : vector<2x4x256xf32>
    %c0_6 = arith.constant 0 : index
    %c0_7 = arith.constant 0 : index
    %c0_8 = arith.constant 0 : index
    %11 = vector.load %arg5[%c0_6, %c0_7, %c0_8] : memref<2x4x256xf32, #tpu.memory_space<vmem>>, vector<2x4x256xf32>
    tpu.vector_store %arg5[%c0_6, %c0_7, %c0_8], %10 {strides = array<i32>} : memref<2x4x256xf32, #tpu.memory_space<vmem>>, vector<2x4x256xf32>,
    return
  }
  func.func @transform_0(%arg0: i32, %arg1: i32) -> (i32, i32, i32) {
    %c0_i32 = arith.constant 0 : i32
    %c0_i32_0 = arith.constant 0 : i32
    return %arg0, %c0_i32, %arg1 : i32, i32, i32
  }
  func.func @transform_1(%arg0: i32, %arg1: i32) -> (i32, i32) {
    %c0_i32 = arith.constant 0 : i32
    %c0_i32_0 = arith.constant 0 : i32
    %c0_i32_1 = arith.constant 0 : i32
    return %c0_i32, %c0_i32_0 : i32, i32
  }
  func.func @transform_2(%arg0: i32, %arg1: i32) -> (i32, i32) {
    %c0_i32 = arith.constant 0 : i32
    %c0_i32_0 = arith.constant 0 : i32
    %c0_i32_1 = arith.constant 0 : i32
    return %c0_i32, %c0_i32_0 : i32, i32
  }
  func.func @transform_3(%arg0: i32, %arg1: i32) -> (i32, i32, i32) {
    %c0_i32 = arith.constant 0 : i32
    %c0_i32_0 = arith.constant 0 : i32
    return %arg0, %c0_i32, %arg1 : i32, i32, i32
  }
}

</mosaic_0001>

<llo_original>
// kernel: nddr_forward.3
$region0: #{nddr_forward.3}
  #allocation0 [shape = 'u32[]', space=smem, size = 0x4, offset = 0x4, fixed_abs, tag = 'smem constant byte address 0x4 - core index']
  #allocation1 [shape = 'u32[144,128]{1,0:T(1,128)}', space=vmem, size = 0x12000, scoped, tag = 'internal scratch']
  %s0 = inlined_call_operand.vmem [shape: f32[2,4,256], index: 0, kind: input, shape index: {}, may-alias: {0,3}]
  %s1 = inlined_call_operand.vmem [shape: f32[4,1], index: 1, kind: input, shape index: {}]
  %s2 = inlined_call_operand.vmem [shape: f32[4,1], index: 2, kind: input, shape index: {}]
  %s3 = inlined_call_operand.vmem [shape: f32[2,4,256], index: 3, kind: output, shape index: {}, may-alias: {0,3}]
  %s4 = sld [smem:[#allocation0]]
  $region22: #{nddr_forward.3} parent=0
    _
  %s6 = ssub.s32 1, %s4
  %s7 = scalar_select 0, %s6, %s4
  // Predicated region
  $region2: #{nddr_forward.3} parent=0 // pred_check
    _
  $region3: #{nddr_forward.3} parent=0 // pred_check_branch
    %9 = sbr.rel (0) target = $region5
  $region4: #{nddr_forward.3} parent=0 // pred_region
    _
  $region5: #{nddr_forward.3} parent=0 // pred_fallthru
    _
  // Predicated region
  $region6: #{nddr_forward.3} parent=0 // pred_check
    _
  $region7: #{nddr_forward.3} parent=0 // pred_check_branch
    %11 = sbr.rel (0) target = $region9
  $region8: #{nddr_forward.3} parent=0 // pred_region
    _
  $region9: #{nddr_forward.3} parent=0 // pred_fallthru
    _
  // Predicated region
  $region10: #{nddr_forward.3} parent=0 // pred_check
    _
  $region11: #{nddr_forward.3} parent=0 // pred_check_branch
    %13 = sbr.rel (0) target = $region13
  $region12: #{nddr_forward.3} parent=0 // pred_region
    _
  $region13: #{nddr_forward.3} parent=0 // pred_fallthru
    _
  %v14 = vld [vmem:[%s0] sm:$0xff]
  %v15 = vld [vmem:[%s0 + $0x8] sm:$0xff]
  %v16 = vld [vmem:[%s1] sm:$0xf]
  %v17 = vld [vmem:[%s2] sm:$0xf]
  %19 = vset.pattern.permute.xlu0 0
  %20 = vperm.xlu0 %19, %v16
  %v21 = vpop.permute.xlu0 %20
  %v23 = vunpack.c.l.s4 839922192
  %v24 = vunpack.c.0.s8 %v23
  %v25 = vlaneseq
  %v26 = vshrl.u32 %v25, 7
  %v27 = vsub.s32 %v24, %v26
  %v28 = vrot.slane %v21, %v27
  %v30 = vmul.f32 %v14, %v28
  %v31 = vmul.f32 %v15, %v28
  %33 = vset.pattern.permute.xlu0 0
  %34 = vperm.xlu0 %33, %v17
  %v35 = vpop.permute.xlu0 %34
  %v37 = vunpack.c.l.s4 839922192
  %v38 = vunpack.c.0.s8 %v37
  %v39 = vlaneseq
  %v40 = vshrl.u32 %v39, 7
  %v41 = vsub.s32 %v38, %v40
  %v42 = vrot.slane %v35, %v41
  %v44 = vadd.f32 %v30, %v42
  %v45 = vadd.f32 %v31, %v42
  %v46 = vmax.f32 %v44, 0.0
  %v47 = vmax.f32 %v45, 0.0
  %48 = vst [vmem:[%s3] sm:$0xff] %v46
  %49 = vst [vmem:[%s3 + $0x8] sm:$0xff] %v47
  // Predicated region
  $region14: #{nddr_forward.3} parent=0 // pred_check
    _
  $region15: #{nddr_forward.3} parent=0 // pred_check_branch
    %51 = sbr.rel (0) target = $region17
  $region16: #{nddr_forward.3} parent=0 // pred_region
    _
  $region17: #{nddr_forward.3} parent=0 // pred_fallthru
    _
  // Predicated region
  $region18: #{nddr_forward.3} parent=0 // pred_check
    _
  $region19: #{nddr_forward.3} parent=0 // pred_check_branch
    %53 = sbr.rel (0) target = $region21
  $region20: #{nddr_forward.3} parent=0 // pred_region
    _
  $region21: #{nddr_forward.3} parent=0 // pred_fallthru
    _

// kernel: nddr_forward.2
$region0: #{nddr_forward.2}
  #allocation0 [shape = 'u32[]', space=smem, size = 0x4, offset = 0x4, fixed_abs, tag = 'smem constant byte address 0x4 - core index']
  #allocation1 [shape = 'u32[144,128]{1,0:T(1,128)}', space=vmem, size = 0x12000, scoped, tag = 'internal scratch']
  %s0 = inlined_call_operand.vmem [shape: f32[2,4,256], index: 0, kind: input, shape index: {}]
  %s1 = inlined_call_operand.vmem [shape: f32[2,4,256], index: 1, kind: input, shape index: {}]
  %s2 = inlined_call_operand.vmem [shape: f32[4,4], index: 2, kind: input, shape index: {}]
  %s3 = inlined_call_operand.vmem [shape: f32[4,4], index: 3, kind: input, shape index: {}]
  %s4 = inlined_call_operand.vmem [shape: f32[2,4,256], index: 4, kind: output, shape index: {0}]
  %s5 = inlined_call_operand.vmem [shape: f32[1,4,1], index: 5, kind: output, shape index: {1}]
  %s6 = inlined_call_operand.vmem [shape: f32[1,4,1], index: 6, kind: output, shape index: {2}]
  %7 = xla_tuple %s4, %s5, %s6
  %s8 = sld [smem:[#allocation0]]
  $region46: #{nddr_forward.2} parent=0
    _
  %s10 = ssub.s32 1, %s8
  %s11 = scalar_select 0, %s10, %s8
  // Predicated region
  $region2: #{nddr_forward.2} parent=0 // pred_check
    _
  $region3: #{nddr_forward.2} parent=0 // pred_check_branch
    %13 = sbr.rel (0) target = $region5
  $region4: #{nddr_forward.2} parent=0 // pred_region
    _
  $region5: #{nddr_forward.2} parent=0 // pred_fallthru
    _
  // Predicated region
  $region6: #{nddr_forward.2} parent=0 // pred_check
    _
  $region7: #{nddr_forward.2} parent=0 // pred_check_branch
    %15 = sbr.rel (0) target = $region9
  $region8: #{nddr_forward.2} parent=0 // pred_region
    _
  $region9: #{nddr_forward.2} parent=0 // pred_fallthru
    _
  // Predicated region
  $region10: #{nddr_forward.2} parent=0 // pred_check
    _
  $region11: #{nddr_forward.2} parent=0 // pred_check_branch
    %17 = sbr.rel (0) target = $region13
  $region12: #{nddr_forward.2} parent=0 // pred_region
    _
  $region13: #{nddr_forward.2} parent=0 // pred_fallthru
    _
  // Predicated region
  $region14: #{nddr_forward.2} parent=0 // pred_check
    _
  $region15: #{nddr_forward.2} parent=0 // pred_check_branch
    %19 = sbr.rel (0) target = $region17
  $region16: #{nddr_forward.2} parent=0 // pred_region
    _
  $region17: #{nddr_forward.2} parent=0 // pred_fallthru
    _
  %p20 = scmp.eq.s32.totalorder 0, 0
  // Predicated region
  $region18: #{nddr_forward.2} parent=0 // pred_check
    %p21 = pneg %p20
  $region19: #{nddr_forward.2} parent=0 // pred_check_branch
    %23 = sbr.rel (%p21) target = $region21
  $region20: #{nddr_forward.2} parent=0 // pred_region
    %vm24 = vcmask 3072
    %25 = vst.msk [vmem:[%s5] sm:$0xf] %vm24, 0.0
    %26 = vst.msk [vmem:[%s6] sm:$0xf] %vm24, 0.0
  $region21: #{nddr_forward.2} parent=0 // pred_fallthru
    _
  %v27 = vld [vmem:[%s2] sm:$0xf]
  %v28 = vld [vmem:[%s0] sm:$0xff]
  %v29 = vld [vmem:[%s3] sm:$0xf]
  %v30 = vld [vmem:[%s1] sm:$0xff]
  %v32 = vcombine.high %v30, %v30
  %vm33 = vcmask 31744
  %v35 = vsel %vm33, %v29, 0
  %vm37 = vcmask 1043456
  %v38 = vsel %vm37, %v30, 0
  %v40 = vsel %vm37, %v32, 0
  %42 = vmatprep.subr.mxu0 %v40
  %43 = vmatpush1.msra.mxu0 %v38
  %44 = vmatprep.subr.mxu0 0.0
  %45 = vmatpush1.msra.mxu0 0.0
  %46 = vmatprep.subr.mxu0 0.0
  %47 = vmatpush1.msra.mxu0 0.0
  %48 = vmatprep.subr.mxu0 0.0
  %49 = vmatpush1.msra.mxu0 0.0
  %50 = vmatprep.subr.mxu0 0.0
  %51 = vmatpush1.msra.mxu0 0.0
  %52 = vmatprep.subr.mxu0 0.0
  %53 = vmatpush1.msra.mxu0 0.0
  %54 = vmatprep.subr.mxu0 0.0
  %55 = vmatpush1.msra.mxu0 0.0
  %56 = vmatprep.subr.mxu0 0.0
  %57 = vmatpush1.msra.mxu0 0.0
  %58 = vmatprep.subr.mxu0 0.0
  %59 = vmatpush1.msra.mxu0 0.0
  %60 = vmatprep.subr.mxu0 0.0
  %61 = vmatpush1.msra.mxu0 0.0
  %62 = vmatprep.subr.mxu0 0.0
  %63 = vmatpush1.msra.mxu0 0.0
  %64 = vmatprep.subr.mxu0 0.0
  %65 = vmatpush1.msra.mxu0 0.0
  %66 = vmatprep.subr.mxu0 0.0
  %67 = vmatpush1.msra.mxu0 0.0
  %68 = vmatprep.subr.mxu0 0.0
  %69 = vmatpush1.msra.mxu0 0.0
  %70 = vmatprep.subr.mxu0 0.0
  %71 = vmatpush1.msra.mxu0 0.0
  %72 = vmatprep.subr.mxu0 0.0
  %73 = vmatpush1.msra.mxu0 0.0
  %74 = vmatprep.subr.mxu0 0.0
  %75 = vmatpush1.msra.mxu0 0.0
  %76 = vmatprep.subr.mxu0 0.0
  %77 = vmatpush1.msra.mxu0 0.0
  %78 = vmatprep.subr.mxu0 0.0
  %79 = vmatpush1.msra.mxu0 0.0
  %80 = vmatprep.subr.mxu0 0.0
  %81 = vmatpush1.msra.mxu0 0.0
  %82 = vmatprep.subr.mxu0 0.0
  %83 = vmatpush1.msra.mxu0 0.0
  %84 = vmatprep.subr.mxu0 0.0
  %85 = vmatpush1.msra.mxu0 0.0
  %86 = vmatprep.subr.mxu0 0.0
  %87 = vmatpush1.msra.mxu0 0.0
  %88 = vmatprep.subr.mxu0 0.0
  %89 = vmatpush1.msra.mxu0 0.0
  %90 = vmatprep.subr.mxu0 0.0
  %91 = vmatpush1.msra.mxu0 0.0
  %92 = vmatprep.subr.mxu0 0.0
  %93 = vmatpush1.msra.mxu0 0.0
  %94 = vmatprep.subr.mxu0 0.0
  %95 = vmatpush1.msra.mxu0 0.0
  %96 = vmatprep.subr.mxu0 0.0
  %97 = vmatpush1.msra.mxu0 0.0
  %98 = vmatprep.subr.mxu0 0.0
  %99 = vmatpush1.msra.mxu0 0.0
  %100 = vmatprep.subr.mxu0 0.0
  %101 = vmatpush1.msra.mxu0 0.0
  %102 = vmatprep.subr.mxu0 0.0
  %103 = vmatpush1.msra.mxu0 0.0
  %104 = vmatprep.subr.mxu0 0.0
  %105 = vmatpush1.msra.mxu0 0.0
  %106 = vmatprep.mubr.f32.mxu0 0.0
  %107 = vmatmul.mubr.f32.gmra.mrb[0].mxu0 %v35
  %v108 = vpop.f32.mrb[0].mxu0
  %v109 = vadd.f32 0.0, %v108
  %v110 = vpop.f32.mrb[0].mxu0
  %v111 = vadd.f32 0.0, %v110
  %112 = vdwg.mxu0
  %v114 = vcombine.high %v28, %v28
  %v116 = vsel %vm33, %v27, 0
  %v118 = vsel %vm37, %v28, 0
  %v120 = vsel %vm37, %v114, 0
  %122 = vmatprep.subr.mxu0 %v120
  %123 = vmatpush1.msra.mxu0 %v118
  %124 = vmatprep.subr.mxu0 0.0
  %125 = vmatpush1.msra.mxu0 0.0
  %126 = vmatprep.subr.mxu0 0.0
  %127 = vmatpush1.msra.mxu0 0.0
  %128 = vmatprep.subr.mxu0 0.0
  %129 = vmatpush1.msra.mxu0 0.0
  %130 = vmatprep.subr.mxu0 0.0
  %131 = vmatpush1.msra.mxu0 0.0
  %132 = vmatprep.subr.mxu0 0.0
  %133 = vmatpush1.msra.mxu0 0.0
  %134 = vmatprep.subr.mxu0 0.0
  %135 = vmatpush1.msra.mxu0 0.0
  %136 = vmatprep.subr.mxu0 0.0
  %137 = vmatpush1.msra.mxu0 0.0
  %138 = vmatprep.subr.mxu0 0.0
  %139 = vmatpush1.msra.mxu0 0.0
  %140 = vmatprep.subr.mxu0 0.0
  %141 = vmatpush1.msra.mxu0 0.0
  %142 = vmatprep.subr.mxu0 0.0
  %143 = vmatpush1.msra.mxu0 0.0
  %144 = vmatprep.subr.mxu0 0.0
  %145 = vmatpush1.msra.mxu0 0.0
  %146 = vmatprep.subr.mxu0 0.0
  %147 = vmatpush1.msra.mxu0 0.0
  %148 = vmatprep.subr.mxu0 0.0
  %149 = vmatpush1.msra.mxu0 0.0
  %150 = vmatprep.subr.mxu0 0.0
  %151 = vmatpush1.msra.mxu0 0.0
  %152 = vmatprep.subr.mxu0 0.0
  %153 = vmatpush1.msra.mxu0 0.0
  %154 = vmatprep.subr.mxu0 0.0
  %155 = vmatpush1.msra.mxu0 0.0
  %156 = vmatprep.subr.mxu0 0.0
  %157 = vmatpush1.msra.mxu0 0.0
  %158 = vmatprep.subr.mxu0 0.0
  %159 = vmatpush1.msra.mxu0 0.0
  %160 = vmatprep.subr.mxu0 0.0
  %161 = vmatpush1.msra.mxu0 0.0
  %162 = vmatprep.subr.mxu0 0.0
  %163 = vmatpush1.msra.mxu0 0.0
  %164 = vmatprep.subr.mxu0 0.0
  %165 = vmatpush1.msra.mxu0 0.0
  %166 = vmatprep.subr.mxu0 0.0
  %167 = vmatpush1.msra.mxu0 0.0
  %168 = vmatprep.subr.mxu0 0.0
  %169 = vmatpush1.msra.mxu0 0.0
  %170 = vmatprep.subr.mxu0 0.0
  %171 = vmatpush1.msra.mxu0 0.0
  %172 = vmatprep.subr.mxu0 0.0
  %173 = vmatpush1.msra.mxu0 0.0
  %174 = vmatprep.subr.mxu0 0.0
  %175 = vmatpush1.msra.mxu0 0.0
  %176 = vmatprep.subr.mxu0 0.0
  %177 = vmatpush1.msra.mxu0 0.0
  %178 = vmatprep.subr.mxu0 0.0
  %179 = vmatpush1.msra.mxu0 0.0
  %180 = vmatprep.subr.mxu0 0.0
  %181 = vmatpush1.msra.mxu0 0.0
  %182 = vmatprep.subr.mxu0 0.0
  %183 = vmatpush1.msra.mxu0 0.0
  %184 = vmatprep.subr.mxu0 0.0
  %185 = vmatpush1.msra.mxu0 0.0
  %186 = vmatprep.mubr.f32.mxu0 0.0
  %187 = vmatmul.mubr.f32.gmra.mrb[0].mxu0 %v116
  %v188 = vpop.f32.mrb[0].mxu0
  %v189 = vadd.f32 %v109, %v188
  %v190 = vpop.f32.mrb[0].mxu0
  %v191 = vadd.f32 %v111, %v190
  %192 = vdwg.mxu0
  %v195 = vcombine.low %v189, %v191
  %197 = vst [vmem:[%s4] sm:$0xff] %v195
  %v198 = vsel %vm37, %v189, 0.0
  %v199 = vsel %vm37, %v191, 0.0
  %v200 = vadd.f32 %v198, %v199
  %201 = vadd.xlane.f32.xlu0 %v200
  %v202 = vpop.xlane.xlu0 %201
  %v203 = vadd.f32 %v202, 0.0
  %v204 = vmul.f32 %v189, %v189
  %v205 = vmul.f32 %v191, %v191
  %v206 = vsel %vm37, %v204, 0.0
  %v207 = vsel %vm37, %v205, 0.0
  %v208 = vadd.f32 %v206, %v207
  %209 = vadd.xlane.f32.xlu0 %v208
  %v210 = vpop.xlane.xlu0 %209
  %v211 = vadd.f32 %v210, 0.0
  %v212 = vld [vmem:[%s2] sm:$0xf]
  %s213 = scalar_lea.vmem %s0, 8
  %v214 = vld [vmem:[%s213] sm:$0xff]
  %v215 = vld [vmem:[%s3] sm:$0xf]
  %s216 = scalar_lea.vmem %s1, 8
  %v217 = vld [vmem:[%s216] sm:$0xff]
  %v219 = vcombine.high %v217, %v217
  %v221 = vsel %vm33, %v215, 0
  %v223 = vsel %vm37, %v217, 0
  %v225 = vsel %vm37, %v219, 0
  %227 = vmatprep.subr.mxu0 %v225
  %228 = vmatpush1.msra.mxu0 %v223
  %229 = vmatprep.subr.mxu0 0.0
  %230 = vmatpush1.msra.mxu0 0.0
  %231 = vmatprep.subr.mxu0 0.0
  %232 = vmatpush1.msra.mxu0 0.0
  %233 = vmatprep.subr.mxu0 0.0
  %234 = vmatpush1.msra.mxu0 0.0
  %235 = vmatprep.subr.mxu0 0.0
  %236 = vmatpush1.msra.mxu0 0.0
  %237 = vmatprep.subr.mxu0 0.0
  %238 = vmatpush1.msra.mxu0 0.0
  %239 = vmatprep.subr.mxu0 0.0
  %240 = vmatpush1.msra.mxu0 0.0
  %241 = vmatprep.subr.mxu0 0.0
  %242 = vmatpush1.msra.mxu0 0.0
  %243 = vmatprep.subr.mxu0 0.0
  %244 = vmatpush1.msra.mxu0 0.0
  %245 = vmatprep.subr.mxu0 0.0
  %246 = vmatpush1.msra.mxu0 0.0
  %247 = vmatprep.subr.mxu0 0.0
  %248 = vmatpush1.msra.mxu0 0.0
  %249 = vmatprep.subr.mxu0 0.0
  %250 = vmatpush1.msra.mxu0 0.0
  %251 = vmatprep.subr.mxu0 0.0
  %252 = vmatpush1.msra.mxu0 0.0
  %253 = vmatprep.subr.mxu0 0.0
  %254 = vmatpush1.msra.mxu0 0.0
  %255 = vmatprep.subr.mxu0 0.0
  %256 = vmatpush1.msra.mxu0 0.0
  %257 = vmatprep.subr.mxu0 0.0
  %258 = vmatpush1.msra.mxu0 0.0
  %259 = vmatprep.subr.mxu0 0.0
  %260 = vmatpush1.msra.mxu0 0.0
  %261 = vmatprep.subr.mxu0 0.0
  %262 = vmatpush1.msra.mxu0 0.0
  %263 = vmatprep.subr.mxu0 0.0
  %264 = vmatpush1.msra.mxu0 0.0
  %265 = vmatprep.subr.mxu0 0.0
  %266 = vmatpush1.msra.mxu0 0.0
  %267 = vmatprep.subr.mxu0 0.0
  %268 = vmatpush1.msra.mxu0 0.0
  %269 = vmatprep.subr.mxu0 0.0
  %270 = vmatpush1.msra.mxu0 0.0
  %271 = vmatprep.subr.mxu0 0.0
  %272 = vmatpush1.msra.mxu0 0.0
  %273 = vmatprep.subr.mxu0 0.0
  %274 = vmatpush1.msra.mxu0 0.0
  %275 = vmatprep.subr.mxu0 0.0
  %276 = vmatpush1.msra.mxu0 0.0
  %277 = vmatprep.subr.mxu0 0.0
  %278 = vmatpush1.msra.mxu0 0.0
  %279 = vmatprep.subr.mxu0 0.0
  %280 = vmatpush1.msra.mxu0 0.0
  %281 = vmatprep.subr.mxu0 0.0
  %282 = vmatpush1.msra.mxu0 0.0
  %283 = vmatprep.subr.mxu0 0.0
  %284 = vmatpush1.msra.mxu0 0.0
  %285 = vmatprep.subr.mxu0 0.0
  %286 = vmatpush1.msra.mxu0 0.0
  %287 = vmatprep.subr.mxu0 0.0
  %288 = vmatpush1.msra.mxu0 0.0
  %289 = vmatprep.subr.mxu0 0.0
  %290 = vmatpush1.msra.mxu0 0.0
  %291 = vmatprep.mubr.f32.mxu0 0.0
  %292 = vmatmul.mubr.f32.gmra.mrb[0].mxu0 %v221
  %v293 = vpop.f32.mrb[0].mxu0
  %v294 = vadd.f32 0.0, %v293
  %v295 = vpop.f32.mrb[0].mxu0
  %v296 = vadd.f32 0.0, %v295
  %297 = vdwg.mxu0
  %v299 = vcombine.high %v214, %v214
  %v301 = vsel %vm33, %v212, 0
  %v303 = vsel %vm37, %v214, 0
  %v305 = vsel %vm37, %v299, 0
  %307 = vmatprep.subr.mxu0 %v305
  %308 = vmatpush1.msra.mxu0 %v303
  %309 = vmatprep.subr.mxu0 0.0
  %310 = vmatpush1.msra.mxu0 0.0
  %311 = vmatprep.subr.mxu0 0.0
  %312 = vmatpush1.msra.mxu0 0.0
  %313 = vmatprep.subr.mxu0 0.0
  %314 = vmatpush1.msra.mxu0 0.0
  %315 = vmatprep.subr.mxu0 0.0
  %316 = vmatpush1.msra.mxu0 0.0
  %317 = vmatprep.subr.mxu0 0.0
  %318 = vmatpush1.msra.mxu0 0.0
  %319 = vmatprep.subr.mxu0 0.0
  %320 = vmatpush1.msra.mxu0 0.0
  %321 = vmatprep.subr.mxu0 0.0
  %322 = vmatpush1.msra.mxu0 0.0
  %323 = vmatprep.subr.mxu0 0.0
  %324 = vmatpush1.msra.mxu0 0.0
  %325 = vmatprep.subr.mxu0 0.0
  %326 = vmatpush1.msra.mxu0 0.0
  %327 = vmatprep.subr.mxu0 0.0
  %328 = vmatpush1.msra.mxu0 0.0
  %329 = vmatprep.subr.mxu0 0.0
  %330 = vmatpush1.msra.mxu0 0.0
  %331 = vmatprep.subr.mxu0 0.0
  %332 = vmatpush1.msra.mxu0 0.0
  %333 = vmatprep.subr.mxu0 0.0
  %334 = vmatpush1.msra.mxu0 0.0
  %335 = vmatprep.subr.mxu0 0.0
  %336 = vmatpush1.msra.mxu0 0.0
  %337 = vmatprep.subr.mxu0 0.0
  %338 = vmatpush1.msra.mxu0 0.0
  %339 = vmatprep.subr.mxu0 0.0
  %340 = vmatpush1.msra.mxu0 0.0
  %341 = vmatprep.subr.mxu0 0.0
  %342 = vmatpush1.msra.mxu0 0.0
  %343 = vmatprep.subr.mxu0 0.0
  %344 = vmatpush1.msra.mxu0 0.0
  %345 = vmatprep.subr.mxu0 0.0
  %346 = vmatpush1.msra.mxu0 0.0
  %347 = vmatprep.subr.mxu0 0.0
  %348 = vmatpush1.msra.mxu0 0.0
  %349 = vmatprep.subr.mxu0 0.0
  %350 = vmatpush1.msra.mxu0 0.0
  %351 = vmatprep.subr.mxu0 0.0
  %352 = vmatpush1.msra.mxu0 0.0
  %353 = vmatprep.subr.mxu0 0.0
  %354 = vmatpush1.msra.mxu0 0.0
  %355 = vmatprep.subr.mxu0 0.0
  %356 = vmatpush1.msra.mxu0 0.0
  %357 = vmatprep.subr.mxu0 0.0
  %358 = vmatpush1.msra.mxu0 0.0
  %359 = vmatprep.subr.mxu0 0.0
  %360 = vmatpush1.msra.mxu0 0.0
  %361 = vmatprep.subr.mxu0 0.0
  %362 = vmatpush1.msra.mxu0 0.0
  %363 = vmatprep.subr.mxu0 0.0
  %364 = vmatpush1.msra.mxu0 0.0
  %365 = vmatprep.subr.mxu0 0.0
  %366 = vmatpush1.msra.mxu0 0.0
  %367 = vmatprep.subr.mxu0 0.0
  %368 = vmatpush1.msra.mxu0 0.0
  %369 = vmatprep.subr.mxu0 0.0
  %370 = vmatpush1.msra.mxu0 0.0
  %371 = vmatprep.mubr.f32.mxu0 0.0
  %372 = vmatmul.mubr.f32.gmra.mrb[0].mxu0 %v301
  %v373 = vpop.f32.mrb[0].mxu0
  %v374 = vadd.f32 %v294, %v373
  %v375 = vpop.f32.mrb[0].mxu0
  %v376 = vadd.f32 %v296, %v375
  %377 = vdwg.mxu0
  %v380 = vcombine.low %v374, %v376
  %s382 = scalar_lea.vmem %s4, 8
  %383 = vst [vmem:[%s382] sm:$0xff] %v380
  %v384 = vsel %vm37, %v374, 0.0
  %v385 = vsel %vm37, %v376, 0.0
  %v386 = vadd.f32 %v384, %v385
  %387 = vadd.xlane.f32.xlu0 %v386
  %v388 = vpop.xlane.xlu0 %387
  %v389 = vadd.f32 %v203, %v388
  %v390 = vmul.f32 %v374, %v374
  %v391 = vmul.f32 %v376, %v376
  %v392 = vsel %vm37, %v390, 0.0
  %v393 = vsel %vm37, %v391, 0.0
  %v394 = vadd.f32 %v392, %v393
  %395 = vadd.xlane.f32.xlu0 %v394
  %v396 = vpop.xlane.xlu0 %395
  %v397 = vadd.f32 %v211, %v396
  %v398 = vld [vmem:[%s5] sm:$0xf]
  %v399 = vadd.f32 %v398, %v389
  %vm400 = vcmask 3072
  %401 = vst.msk [vmem:[%s5] sm:$0xf] %vm400, %v399
  %v402 = vld [vmem:[%s6] sm:$0xf]
  %v403 = vadd.f32 %v402, %v397
  %404 = vst.msk [vmem:[%s6] sm:$0xf] %vm400, %v403
  // Predicated region
  $region22: #{nddr_forward.2} parent=0 // pred_check
    _
  $region23: #{nddr_forward.2} parent=0 // pred_check_branch
    %406 = sbr.rel (0) target = $region25
  $region24: #{nddr_forward.2} parent=0 // pred_region
    _
  $region25: #{nddr_forward.2} parent=0 // pred_fallthru
    _
  // Predicated region
  $region26: #{nddr_forward.2} parent=0 // pred_check
    _
  $region27: #{nddr_forward.2} parent=0 // pred_check_branch
    %408 = sbr.rel (0) target = $region29
  $region28: #{nddr_forward.2} parent=0 // pred_region
    _
  $region29: #{nddr_forward.2} parent=0 // pred_fallthru
    _
  // Predicated region
  $region30: #{nddr_forward.2} parent=0 // pred_check
    _
  $region31: #{nddr_forward.2} parent=0 // pred_check_branch
    %410 = sbr.rel (0) target = $region33
  $region32: #{nddr_forward.2} parent=0 // pred_region
    _
  $region33: #{nddr_forward.2} parent=0 // pred_fallthru
    _
  // Predicated region
  $region34: #{nddr_forward.2} parent=0 // pred_check
    _
  $region35: #{nddr_forward.2} parent=0 // pred_check_branch
    %412 = sbr.rel (0) target = $region37
  $region36: #{nddr_forward.2} parent=0 // pred_region
    _
  $region37: #{nddr_forward.2} parent=0 // pred_fallthru
    _
  // Predicated region
  $region38: #{nddr_forward.2} parent=0 // pred_check
    _
  $region39: #{nddr_forward.2} parent=0 // pred_check_branch
    %414 = sbr.rel (0) target = $region41
  $region40: #{nddr_forward.2} parent=0 // pred_region
    _
  $region41: #{nddr_forward.2} parent=0 // pred_fallthru
    _
  // Predicated region
  $region42: #{nddr_forward.2} parent=0 // pred_check
    _
  $region43: #{nddr_forward.2} parent=0 // pred_check_branch
    %416 = sbr.rel (0) target = $region45
  $region44: #{nddr_forward.2} parent=0 // pred_region
    _
  $region45: #{nddr_forward.2} parent=0 // pred_fallthru
    _

</llo_original>
